<compile_context>
chip_gen: v5e
topology: v5e:2x2
jax: 0.10.0
libtpu: 0.0.40
codegen_flags: <defaults>
</compile_context>

<pallas_src>
import math

import jax
import jax.numpy as jnp
import numpy as np
from jax.experimental import pallas as pl
from jax.experimental.pallas import tpu as pltpu


def _make_ipd_kernel(index_l, index_r, cos, sin):
    """Builds the kernel body for a fixed, compile-time pair list / mode."""
    pairs = tuple(zip(index_l, index_r))
    two_pi = float(2.0 * math.pi)

    def kernel(p_ref, o_ref):
        # p_ref: (1, C, tL) phases.  o_ref: (1, M, tL) or (1, M, 2, tL).
        x = p_ref[0].astype(jnp.float32)                                  # (C, tL)
        # Static sublane gather of the left / right channel of every pair.
        xl = jnp.concatenate([x[l:l + 1, :] for l, _ in pairs], axis=0)   # (M, tL)
        xr = jnp.concatenate([x[r:r + 1, :] for _, r in pairs], axis=0)   # (M, tL)
        d = xl - xr
        if cos:
            if sin:
                o_ref[0, :, 0, :] = jnp.cos(d).astype(o_ref.dtype)
                o_ref[0, :, 1, :] = jnp.sin(d).astype(o_ref.dtype)
            else:
                o_ref[0] = jnp.cos(d).astype(o_ref.dtype)
        else:
            # torch.fmod(d, 2*pi) - pi, with C-style (truncated) division.
            q = jnp.trunc(d * jnp.float32(1.0 / two_pi))
            o_ref[0] = (d - q * jnp.float32(two_pi)
                        - jnp.float32(math.pi)).astype(o_ref.dtype)

    return kernel


def _pick_lane_tile(L, max_tile=8192):
    """Largest power-of-two multiple of 128 (<= max_tile) that divides L."""
    if L % 128 == 0:
        t = max_tile
        while t >= 128:
            if L % t == 0:
                return t
            t //= 2
    # TODO(synk): if F*T is not a multiple of 128, fall back to a single
    #             full-width block per batch element (legal, just untiled).
    return L


def ipd_feature(p, index_l, index_r, cos=True, sin=False):
    """IPD of phase p (N, C, F, T) for the given compile-time channel pairs."""
    if p.ndim == 3:
        p = p[None]
    N, C, F, T = p.shape
    M = len(index_l)
    if len(index_r) != M:
        raise ValueError("index_l / index_r length mismatch")
    all_idx = list(index_l) + list(index_r)
    if min(all_idx) < 0 or max(all_idx) >= C:
        raise ValueError(f"channel pair index out of range for C={C}: {all_idx}")

    L = F * T
    tL = _pick_lane_tile(L)
    num_t = L // tL
    p_flat = p.reshape(N, C, L)
    out_dtype = p.dtype
    both = bool(cos and sin)

    in_spec = pl.BlockSpec((1, C, tL), lambda n, t: (n, 0, t))
    if both:
        out_kshape = (N, M, 2, L)
        out_spec = pl.BlockSpec((1, M, 2, tL), lambda n, t: (n, 0, 0, t))
    else:
        out_kshape = (N, M, L)
        out_spec = pl.BlockSpec((1, M, tL), lambda n, t: (n, 0, t))

    in_bytes = jnp.dtype(p.dtype).itemsize
    out_bytes = jnp.dtype(out_dtype).itemsize
    out_elems = N * M * (2 if both else 1) * L
    cost = pl.CostEstimate(
        flops=N * M * L,
        transcendentals=(out_elems if cos else 0),
        bytes_accessed=N * C * L * in_bytes + out_elems * out_bytes,
    )

    # Double-buffered per-step working set + headroom, capped for v7x VMEM.
    step_bytes = 2 * (C * tL * in_bytes
                      + M * (2 if both else 1) * tL * out_bytes)
    vmem_limit = int(min(max(4 * step_bytes, 8 * 1024 * 1024), 32 * 1024 * 1024))

    kernel = _make_ipd_kernel(tuple(index_l), tuple(index_r), cos, sin)

    out = pl.pallas_call(
        kernel,
        out_shape=jax.ShapeDtypeStruct(out_kshape, out_dtype),
        grid_spec=pltpu.PrefetchScalarGridSpec(
            num_scalar_prefetch=0,
            grid=(N, num_t),
            in_specs=[in_spec],
            out_specs=out_spec,
        ),
        compiler_params=pltpu.CompilerParams(
            dimension_semantics=("parallel", "parallel"),
            vmem_limit_bytes=vmem_limit,
        ),
        cost_estimate=cost,
    )(p_flat)

    if both:
        # (N, M, 2, F*T) -> (N, M, 2F, T): matches torch.cat([cos, sin], dim=2).
        return out.reshape(N, M, 2 * F, T)
    return out.reshape(N, M, F, T)


class IPDFeaturePallas:
    """Mirror of the PyTorch IPDFeature module (cos / cos+sin / fmod modes)."""

    def __init__(self, ipd_index='0,0;1,0;2,0;3,0;4,0;5,0;6,0;7,0',
                 cos=True, sin=False):
        pair = [tuple(map(int, s.split(','))) for s in ipd_index.split(';')]
        self.index_l = [t[0] for t in pair]
        self.index_r = [t[1] for t in pair]
        self.ipd_index = ipd_index
        self.cos = cos
        self.sin = sin
        self.num_pairs = len(pair) * 2 if cos and sin else len(pair)

    def __call__(self, p):
        if p.ndim not in (3, 4):
            raise RuntimeError(f"IPDFeature expects 3/4D tensor, got {p.ndim}D")
        if p.ndim == 3:
            p = p[None]
        return ipd_feature(p, self.index_l, self.index_r,
                           cos=self.cos, sin=self.sin)


if __name__ == "__main__":
    key = jax.random.PRNGKey(0)
    N, C, F, T = 2, 8, 16, 32
    # Phases in [-pi, pi).
    p = (jax.random.uniform(key, (N, C, F, T), dtype=jnp.float32) * 2.0 - 1.0) * np.pi

    # --- default config: cos=True, sin=False ---------------------------------
    mod = IPDFeaturePallas()
    out = jax.block_until_ready(mod(p))
    il = jnp.asarray(mod.index_l)
    ir = jnp.asarray(mod.index_r)
    dif = p[:, il] - p[:, ir]
    ref = jnp.cos(dif)
    np.testing.assert_allclose(np.asarray(out), np.asarray(ref), rtol=1e-5, atol=1e-5)
    assert out.shape == (N, mod.num_pairs, F, T)

    # --- cos=True, sin=True (concat along F) ---------------------------------
    mod_cs = IPDFeaturePallas(cos=True, sin=True)
    out_cs = jax.block_until_ready(mod_cs(p))
    ref_cs = jnp.concatenate([jnp.cos(dif), jnp.sin(dif)], axis=2)
    np.testing.assert_allclose(np.asarray(out_cs), np.asarray(ref_cs),
                               rtol=1e-5, atol=1e-5)
    assert out_cs.shape == (N, len(mod_cs.index_l), 2 * F, T)

    # --- cos=False (fmod branch) ----------------------------------------------
    mod_fm = IPDFeaturePallas(cos=False, sin=False)
    out_fm = jax.block_until_ready(mod_fm(p))
    ref_fm = jnp.fmod(dif, 2.0 * np.pi) - np.pi
    np.testing.assert_allclose(np.asarray(out_fm), np.asarray(ref_fm),
                               rtol=1e-5, atol=1e-5)

    # --- bf16 I/O (f32 math inside the kernel) --------------------------------
    p_bf = p.astype(jnp.bfloat16)
    out_bf = jax.block_until_ready(mod(p_bf))
    assert out_bf.dtype == jnp.bfloat16 and out_bf.shape == (N, mod.num_pairs, F, T)
    p_bf_f32 = p_bf.astype(jnp.float32)
    ref_bf = jnp.cos(p_bf_f32[:, il] - p_bf_f32[:, ir])
    np.testing.assert_allclose(np.asarray(out_bf.astype(jnp.float32)),
                               np.asarray(ref_bf), rtol=0, atol=2e-2)

    print("KERNEL_OK")
</pallas_src>

<mosaic_0001>
module attributes {stable_mosaic.version = 11 : i64} {
  func.func @kernel(%arg0: i32, %arg1: i32, %arg2: memref<1x8x512xf32, #tpu.memory_space<vmem>>, %arg3: memref<1x8x512xf32, #tpu.memory_space<vmem>>) attributes {dimension_semantics = [#tpu.dimension_semantics<parallel>, #tpu.dimension_semantics<parallel>], iteration_bounds = array<i64: 2, 1>, scalar_prefetch = 0 : i64, scratch_operands = 0 : i64, tpu.core_type = #tpu.core_type<tc>, window_params = [{transform_indices = @transform_0, window_bounds = array<i64: 1, 8, 512>}, {transform_indices = @transform_1, window_bounds = array<i64: 1, 8, 512>}]} {
    %c0 = arith.constant 0 : index
    %c0_0 = arith.constant 0 : index
    %c0_1 = arith.constant 0 : index
    %0 = vector.load %arg2[%c0, %c0_0, %c0_1] : memref<1x8x512xf32, #tpu.memory_space<vmem>>, vector<1x8x512xf32>
    %1 = vector.shape_cast %0 : vector<1x8x512xf32> to vector<8x512xf32>
    %2 = vector.extract_strided_slice %1 {offsets = [0, 0], sizes = [1, 512], strides = [1, 1]} : vector<8x512xf32> to vector<1x512xf32>
    %3 = vector.extract_strided_slice %1 {offsets = [1, 0], sizes = [1, 512], strides = [1, 1]} : vector<8x512xf32> to vector<1x512xf32>
    %4 = vector.extract_strided_slice %1 {offsets = [2, 0], sizes = [1, 512], strides = [1, 1]} : vector<8x512xf32> to vector<1x512xf32>
    %5 = vector.extract_strided_slice %1 {offsets = [3, 0], sizes = [1, 512], strides = [1, 1]} : vector<8x512xf32> to vector<1x512xf32>
    %6 = vector.extract_strided_slice %1 {offsets = [4, 0], sizes = [1, 512], strides = [1, 1]} : vector<8x512xf32> to vector<1x512xf32>
    %7 = vector.extract_strided_slice %1 {offsets = [5, 0], sizes = [1, 512], strides = [1, 1]} : vector<8x512xf32> to vector<1x512xf32>
    %8 = vector.extract_strided_slice %1 {offsets = [6, 0], sizes = [1, 512], strides = [1, 1]} : vector<8x512xf32> to vector<1x512xf32>
    %9 = vector.extract_strided_slice %1 {offsets = [7, 0], sizes = [1, 512], strides = [1, 1]} : vector<8x512xf32> to vector<1x512xf32>
    %10 = tpu.concatenate %2, %3, %4, %5, %6, %7, %8, %9 in 0 : vector<1x512xf32>, vector<1x512xf32>, vector<1x512xf32>, vector<1x512xf32>, vector<1x512xf32>, vector<1x512xf32>, vector<1x512xf32>, vector<1x512xf32> -> vector<8x512xf32>
    %11 = vector.extract_strided_slice %1 {offsets = [0, 0], sizes = [1, 512], strides = [1, 1]} : vector<8x512xf32> to vector<1x512xf32>
    %12 = vector.extract_strided_slice %1 {offsets = [0, 0], sizes = [1, 512], strides = [1, 1]} : vector<8x512xf32> to vector<1x512xf32>
    %13 = vector.extract_strided_slice %1 {offsets = [0, 0], sizes = [1, 512], strides = [1, 1]} : vector<8x512xf32> to vector<1x512xf32>
    %14 = vector.extract_strided_slice %1 {offsets = [0, 0], sizes = [1, 512], strides = [1, 1]} : vector<8x512xf32> to vector<1x512xf32>
    %15 = vector.extract_strided_slice %1 {offsets = [0, 0], sizes = [1, 512], strides = [1, 1]} : vector<8x512xf32> to vector<1x512xf32>
    %16 = vector.extract_strided_slice %1 {offsets = [0, 0], sizes = [1, 512], strides = [1, 1]} : vector<8x512xf32> to vector<1x512xf32>
    %17 = vector.extract_strided_slice %1 {offsets = [0, 0], sizes = [1, 512], strides = [1, 1]} : vector<8x512xf32> to vector<1x512xf32>
    %18 = vector.extract_strided_slice %1 {offsets = [0, 0], sizes = [1, 512], strides = [1, 1]} : vector<8x512xf32> to vector<1x512xf32>
    %19 = tpu.concatenate %11, %12, %13, %14, %15, %16, %17, %18 in 0 : vector<1x512xf32>, vector<1x512xf32>, vector<1x512xf32>, vector<1x512xf32>, vector<1x512xf32>, vector<1x512xf32>, vector<1x512xf32>, vector<1x512xf32> -> vector<8x512xf32>
    %20 = arith.subf %10, %19 : vector<8x512xf32>
    %21 = math.cos %20 : vector<8x512xf32>
    %c0_2 = arith.constant 0 : index
    %c0_3 = arith.constant 0 : index
    %c0_4 = arith.constant 0 : index
    %22 = vector.load %arg3[%c0_2, %c0_3, %c0_4] : memref<1x8x512xf32, #tpu.memory_space<vmem>>, vector<1x8x512xf32>
    %23 = vector.shape_cast %22 : vector<1x8x512xf32> to vector<8x512xf32>
    %24 = vector.shape_cast %21 : vector<8x512xf32> to vector<1x8x512xf32>
    tpu.vector_store %arg3[%c0_2, %c0_3, %c0_4], %24 {strides = array<i32>} : memref<1x8x512xf32, #tpu.memory_space<vmem>>, vector<1x8x512xf32>,
    return
  }
  func.func @transform_0(%arg0: i32, %arg1: i32) -> (i32, i32, i32) {
    %c0_i32 = arith.constant 0 : i32
    %c0_i32_0 = arith.constant 0 : i32
    return %arg0, %c0_i32, %arg1 : i32, i32, i32
  }
  func.func @transform_1(%arg0: i32, %arg1: i32) -> (i32, i32, i32) {
    %c0_i32 = arith.constant 0 : i32
    %c0_i32_0 = arith.constant 0 : i32
    return %arg0, %c0_i32, %arg1 : i32, i32, i32
  }
}

</mosaic_0001>

<llo_original>
// kernel: tpu_custom_call.1
$region0: #{tpu_custom_call.1}
  #allocation0 [shape = 'u32[]', space=smem, size = 0x4, offset = 0x4, fixed_abs, tag = 'smem constant byte address 0x4 - core index']
  #allocation1 [shape = 'u32[72,128]{1,0:T(1,128)}', space=vmem, size = 0x9000, scoped, tag = 'internal scratch']
  %s0 = inlined_call_operand.hbm [shape: f32[2,8,512], index: 0, kind: input, shape index: {}]
  %s1 = inlined_call_operand.hbm [shape: f32[2,8,512], index: 1, kind: output, shape index: {}]
  %s2 = sld [smem:[#allocation0]]
  $region41: #{tpu_custom_call.1} parent=0
    _
  %s4 = ssub.s32 1, %s2
  %s5 = scalar_select 0, %s4, %s2
  $region1: #{tpu_custom_call.1} parent=0
    #allocation2 [shape = 'u8[32768]{0}', space=vmem, size = 0x8000, scoped, tag = 'input window, operand 0']
    #allocation3 [shape = 's32[2]{0}', space=sflag, size = 0x8, scoped, tag = 'scoped memory for tpu_custom_call.1']
    #allocation4 [shape = 's32[2]{0}', space=sflag, size = 0x8, scoped, tag = 'scoped memory for tpu_custom_call.1']
    #allocation5 [shape = 'u8[32768]{0}', space=vmem, size = 0x8000, scoped, tag = 'output window, operand 0']
    %6 = vsyncpa [#allocation3], 0
    %s7 = scalar_lea.sflag [#allocation3], 1
    %8 = vsyncpa %s7, 0
    %9 = vsyncpa [#allocation4], 0
    %s10 = scalar_lea.sflag [#allocation4], 1
    %11 = vsyncpa %s10, 0
    loop: start=0, step=1, limit=4
    $region2: #{tpu_custom_call.1} parent=1 // loop_pre_header
      _
    $region3: #{tpu_custom_call.1} parent=1 // loop_header
      %s13 = sphi 0, %s17
      %p14 = scmp.ge.s32.totalorder %s13, 4
      %s20 = sphi 0, %s32
      %s21 = sphi 0, %s28
      %s22 = sphi 0, %s20
      %s23 = sphi 0, %s21
      %s24 = sphi 0, %s22
      %s25 = sphi 0, %s23
      %s37 = sphi 0, %s39
      %s40 = sphi 0, %s37
      %s41 = sphi 0, %s40
      %s57 = sphi 0, %s41
      %s65 = sphi 0, %s67
      %s68 = sphi 0, %s65
      %s69 = sphi 0, %s68
      %s85 = sphi 0, %s69
    $region4: #{tpu_custom_call.1} parent=1 // loop_header_branch
      %16 = sbr.rel (%p14) target = $region8
    $region5: #{tpu_custom_call.1} parent=1 // loop_body
      %s18 = ssub.s32 %s13, 1
      %s19 = ssub.s32 %s13, 2
      %s26 = sadd.s32 1, %s21
      %p27 = scmp.ge.s32.totalorder %s26, 1
      %s28 = scalar_select %p27, 0, %s26
      %s29 = sadd.s32 1, %s20
      %s30 = scalar_select %p27, %s29, %s20
      %p31 = scmp.ge.s32.totalorder %s30, 2
      %s32 = scalar_select %p31, 0, %s30
      %s33 = ssub.s32 %s20, %s32
      %s34 = ssub.s32 %s21, %s28
      %s35 = sor.u32 %s33, %s34
      %p36 = scmp.eq.s32.totalorder %s35, 0
      %s38 = sadd.s32 %s37, 1
      %s39 = scalar_select %p36, %s37, %s38
      %p42 = pneg %p36
      %p43 = scmp.eq.s32.totalorder %s13, 1
      %p44 = por %p42, %p43
      %p45 = scmp.ne.s32.totalorder %s37, %s40
      %p46 = scmp.eq.s32.totalorder %s13, 0
      %p47 = por %p45, %p46
      %p48 = scmp.ne.s32.totalorder %s37, %s40
      %p49 = scmp.eq.s32.totalorder %s18, 1
      %p50 = por %p48, %p49
      %p51 = scmp.ne.s32.totalorder %s40, %s41
      %p52 = scmp.eq.s32.totalorder %s18, 0
      %p53 = por %p51, %p52
      %p54 = scmp.ne.s32.totalorder %s40, %s41
      %p55 = scmp.eq.s32.totalorder %s19, 1
      %p56 = por %p54, %p55
      %p58 = scmp.ne.s32.totalorder %s41, %s57
      %p59 = scmp.eq.s32.totalorder %s19, 0
      %p60 = por %p58, %p59
      %s61 = ssub.s32 %s20, %s32
      %s62 = ssub.s32 %s21, %s28
      %s63 = sor.u32 %s61, %s62
      %p64 = scmp.eq.s32.totalorder %s63, 0
      %s66 = sadd.s32 %s65, 1
      %s67 = scalar_select %p64, %s65, %s66
      %p70 = pneg %p64
      %p71 = scmp.eq.s32.totalorder %s13, 1
      %p72 = por %p70, %p71
      %p73 = scmp.ne.s32.totalorder %s65, %s68
      %p74 = scmp.eq.s32.totalorder %s13, 0
      %p75 = por %p73, %p74
      %p76 = scmp.ne.s32.totalorder %s65, %s68
      %p77 = scmp.eq.s32.totalorder %s18, 1
      %p78 = por %p76, %p77
      %p79 = scmp.ne.s32.totalorder %s68, %s69
      %p80 = scmp.eq.s32.totalorder %s18, 0
      %p81 = por %p79, %p80
      %p82 = scmp.ne.s32.totalorder %s68, %s69
      %p83 = scmp.eq.s32.totalorder %s19, 1
      %p84 = por %p82, %p83
      %p86 = scmp.ne.s32.totalorder %s69, %s85
      %p87 = scmp.eq.s32.totalorder %s19, 0
      %p88 = por %p86, %p87
      %p89 = scmp.le.s32.totalorder 1, %s13
      %p90 = scmp.lt.s32.totalorder %s13, 3
      %p91 = pnand %p89, %p90
      %p92 = pneg %p91
      // Predicated region
      $region9: #{tpu_custom_call.1} parent=5 // pred_check
        _
      $region10: #{tpu_custom_call.1} parent=5 // pred_check_branch
        %94 = sbr.rel (%p91) target = $region12
      $region11: #{tpu_custom_call.1} parent=5 // pred_region
        %s95 = ssub.s32 %s13, 1
      $region12: #{tpu_custom_call.1} parent=5 // pred_fallthru
        _
      %p96 = scmp.lt.s32.totalorder %s13, 2
      // Predicated region
      $region13: #{tpu_custom_call.1} parent=5 // pred_check
        %p97 = pneg %p96
      $region14: #{tpu_custom_call.1} parent=5 // pred_check_branch
        %99 = sbr.rel (%p97) target = $region16
      $region15: #{tpu_custom_call.1} parent=5 // pred_region
        // Predicated region
        $region17: #{tpu_custom_call.1} parent=15 // pred_check
          %p100 = pneg %p47
        $region18: #{tpu_custom_call.1} parent=15 // pred_check_branch
          %102 = sbr.rel (%p100) target = $region20
        $region19: #{tpu_custom_call.1} parent=15 // pred_region
          %s103 = sand.u32 %s37, 1
          %s104 = scalar_lea.sflag [#allocation3], %s103
          %s105 = sand.u32 %s37, 1
          %s106 = smul.addr %s105, 32
          %s107 = scalar_lea.vmem [#allocation2], %s106
          %s108 = smul.u32 4, %s21
          %110 = vsyncadd %s104, 0
          %s111 = smul.addr %s20, 4
          %s112 = sadd.s32 %s108, %s111
          %s113 = smul.addr %s112, 8
          %s114 = scalar_lea.hbm %s0, %s113
          %s116 = sshll.u32 %s114, 4
          %s117 = int_to_ptr.hbm [resolvable:$true] %s116
          %s118 = sshll.u32 %s107, 4
          %s119 = int_to_ptr.vmem [resolvable:$true] %s118
          %121 = dma.hbm_to_vmem [thread:$0]  %s117, 512, %s119, %s104
        $region20: #{tpu_custom_call.1} parent=15 // pred_fallthru
          _
      $region16: #{tpu_custom_call.1} parent=5 // pred_fallthru
        _
      %p122 = scmp.le.s32.totalorder 1, %s13
      %p123 = scmp.lt.s32.totalorder %s13, 3
      %p124 = pnand %p122, %p123
      %p125 = pneg %p124
      // Predicated region
      $region21: #{tpu_custom_call.1} parent=5 // pred_check
        _
      $region22: #{tpu_custom_call.1} parent=5 // pred_check_branch
        %127 = sbr.rel (%p124) target = $region24
      $region23: #{tpu_custom_call.1} parent=5 // pred_region
        %s128 = ssub.s32 %s13, 1
        %s129 = sand.u32 %s40, 1
        %s130 = scalar_lea.sflag [#allocation3], %s129
        %s131 = sand.u32 %s40, 1
        %s132 = smul.addr %s131, 32
        %s133 = scalar_lea.vmem [#allocation2], %s132
        // Predicated region
        $region25: #{tpu_custom_call.1} parent=23 // pred_check
          %p134 = pneg %p53
        $region26: #{tpu_custom_call.1} parent=23 // pred_check_branch
          %136 = sbr.rel (%p134) target = $region28
        $region27: #{tpu_custom_call.1} parent=23 // pred_region
          %138 = dma.done %s130, 512
        $region28: #{tpu_custom_call.1} parent=23 // pred_fallthru
          _
        %s139 = sand.u32 %s40, 1
        %s140 = scalar_lea.sflag [#allocation3], %s139
        %s141 = sand.u32 %s40, 1
        %s142 = smul.addr %s141, 32
        %s143 = scalar_lea.vmem [#allocation2], %s142
        %p144 = pneg %p53
        %p145 = pneg %p50
        %p146 = pneg %p81
        %p147 = pneg %p78
        %s148 = sand.u32 %s68, 1
        %s149 = scalar_lea.sflag [#allocation4], %s148
        %s150 = sand.u32 %s68, 1
        %s151 = smul.addr %s150, 32
        %s152 = scalar_lea.vmem [#allocation5], %s151
        %s153 = smul.u32 4, %s23
        %s154 = smul.u32 4, %s23
        %v155 = vld [vmem:[%s133] sm:$0xff]
        %v156 = vld [vmem:[%s133 + $0x8] sm:$0xff]
        %v157 = vld [vmem:[%s133 + $0x10] sm:$0xff]
        %v158 = vld [vmem:[%s133 + $0x18] sm:$0xff]
        %v163 = vrot.slane %v155, 7
        %v164 = vrot.slane %v156, 7
        %v165 = vrot.slane %v157, 7
        %v166 = vrot.slane %v158, 7
        %v171 = vrot.slane %v155, 6
        %v172 = vrot.slane %v156, 6
        %v173 = vrot.slane %v157, 6
        %v174 = vrot.slane %v158, 6
        %v179 = vrot.slane %v155, 5
        %v180 = vrot.slane %v156, 5
        %v181 = vrot.slane %v157, 5
        %v182 = vrot.slane %v158, 5
        %v187 = vrot.slane %v155, 4
        %v188 = vrot.slane %v156, 4
        %v189 = vrot.slane %v157, 4
        %v190 = vrot.slane %v158, 4
        %v195 = vrot.slane %v155, 3
        %v196 = vrot.slane %v156, 3
        %v197 = vrot.slane %v157, 3
        %v198 = vrot.slane %v158, 3
        %v203 = vrot.slane %v155, 2
        %v204 = vrot.slane %v156, 2
        %v205 = vrot.slane %v157, 2
        %v206 = vrot.slane %v158, 2
        %v211 = vrot.slane %v155, 1
        %v212 = vrot.slane %v156, 1
        %v213 = vrot.slane %v157, 1
        %v214 = vrot.slane %v158, 1
        %vm219 = vcmask 1040384
        %v220 = vsel %vm219, %v155, %v163
        %v221 = vsel %vm219, %v156, %v164
        %v222 = vsel %vm219, %v157, %v165
        %v223 = vsel %vm219, %v158, %v166
        %vm224 = vcmask 1041408
        %v225 = vsel %vm224, %v220, %v171
        %v226 = vsel %vm224, %v221, %v172
        %v227 = vsel %vm224, %v222, %v173
        %v228 = vsel %vm224, %v223, %v174
        %vm229 = vcmask 1042432
        %v230 = vsel %vm229, %v225, %v179
        %v231 = vsel %vm229, %v226, %v180
        %v232 = vsel %vm229, %v227, %v181
        %v233 = vsel %vm229, %v228, %v182
        %vm234 = vcmask 1043456
        %v235 = vsel %vm234, %v230, %v187
        %v236 = vsel %vm234, %v231, %v188
        %v237 = vsel %vm234, %v232, %v189
        %v238 = vsel %vm234, %v233, %v190
        %vm239 = vcmask 1044480
        %v240 = vsel %vm239, %v235, %v195
        %v241 = vsel %vm239, %v236, %v196
        %v242 = vsel %vm239, %v237, %v197
        %v243 = vsel %vm239, %v238, %v198
        %vm244 = vcmask 1045504
        %v245 = vsel %vm244, %v240, %v203
        %v246 = vsel %vm244, %v241, %v204
        %v247 = vsel %vm244, %v242, %v205
        %v248 = vsel %vm244, %v243, %v206
        %vm249 = vcmask 1046528
        %v250 = vsel %vm249, %v245, %v211
        %v251 = vsel %vm249, %v246, %v212
        %v252 = vsel %vm249, %v247, %v213
        %v253 = vsel %vm249, %v248, %v214
        %v254 = vsub.f32 %v155, %v250
        %v255 = vsub.f32 %v156, %v251
        %v256 = vsub.f32 %v157, %v252
        %v257 = vsub.f32 %v158, %v253
        %v258 = vand.u32 2147483647, %v254
        %vm259 = vcmp.le.f32.partialorder %v258, 0.7853982
        %vm260 = vcmp.lt.s32.totalorder %v254, 0
        %v261 = vand.u32 %v254, 2139095040
        %v262 = vshrl.u32 %v261, 23
        %v263 = vsub.s32 %v262, 127
        %v264 = vand.u32 2147483647, %v254
        %v265 = vand.u32 %v264, 8388607
        %v266 = vor.u32 %v265, 8388608
        %v267 = vsub.s32 0, %v266
        %v268 = vadd.s32 %v263, 1
        %vm269 = vcmp.gt.s32.totalorder %v268, 0
        %v270 = vsel %vm269, %v268, 0
        %v271 = vshrl.u32 %v270, 5
        %v272 = vand.u32 %v270, 31
        %v273 = vsub.s32 32, %v272
        %v274 = vshrl.u32 683565275, %v273
        %v275 = vshll.u32 683565275, %v272
        %v276 = vshrl.u32 2475754826, %v273
        %v277 = vor.u32 %v275, %v276
        %v278 = vshll.u32 2475754826, %v272
        %v279 = vshrl.u32 2131351028, %v273
        %v280 = vor.u32 %v278, %v279
        %v281 = vshll.u32 2131351028, %v272
        %v282 = vshrl.u32 2102212464, %v273
        %v283 = vor.u32 %v281, %v282
        %v284 = vshll.u32 2102212464, %v272
        %v285 = vshrl.u32 920167782, %v273
        %v286 = vor.u32 %v284, %v285
        %v287 = vshll.u32 920167782, %v272
        %v288 = vshrl.u32 1326507024, %v273
        %v289 = vor.u32 %v287, %v288
        %vm290 = vcmp.lt.s32.totalorder %v271, 1
        %vm291 = vcmp.lt.s32.totalorder %v271, 2
        %vm292 = vcmp.lt.s32.totalorder %v271, 3
        %vm293 = vcmp.lt.s32.totalorder %v271, 4
        %v294 = vsel %vm290, %v274, %v277
        %v295 = vsel %vm293, %v283, 2102212464
        %v296 = vsel %vm292, %v280, %v295
        %v297 = vsel %vm291, %v294, %v296
        %v298 = vsel %vm290, %v277, %v280
        %v299 = vsel %vm293, %v286, 920167782
        %v300 = vsel %vm292, %v283, %v299
        %v301 = vsel %vm291, %v298, %v300
        %v302 = vsel %vm290, %v280, %v283
        %v303 = vsel %vm293, %v289, 1326507024
        %v304 = vsel %vm292, %v286, %v303
        %v305 = vsel %vm291, %v302, %v304
        %v306 = vshll.u32 %v266, 8
        %v307 = vand.u32 %v306, 65535
        %v308 = vshrl.u32 %v306, 16
        %v309 = vand.u32 %v305, 65535
        %v310 = vshrl.u32 %v305, 16
        %v311 = vmul.u32 %v307, %v309
        %v312 = vmul.u32 %v307, %v310
        %v313 = vmul.u32 %v308, %v309
        %v314 = vmul.u32 %v308, %v310
        %v315 = vshll.u32 %v312, 16
        %v316 = vshrl.u32 %v312, 16
        %v317 = vshll.u32 %v313, 16
        %v318 = vshrl.u32 %v313, 16
        %vm319 = vc.u32 %v311, %v315
        %v320 = vsel %vm319, 1, 0
        %v321 = vadd.s32 %v311, %v315
        %v322 = vadd.s32 %v314, %v320
        %vm323 = vc.u32 %v321, %v317
        %v324 = vsel %vm323, 1, 0
        %v325 = vadd.s32 %v321, %v317
        %v326 = vadd.s32 %v322, %v324
        %v327 = vadd.s32 %v326, %v316
        %v328 = vadd.s32 %v327, %v318
        %v329 = vand.u32 %v306, 65535
        %v330 = vshrl.u32 %v306, 16
        %v331 = vand.u32 %v301, 65535
        %v332 = vshrl.u32 %v301, 16
        %v333 = vmul.u32 %v329, %v331
        %v334 = vmul.u32 %v329, %v332
        %v335 = vmul.u32 %v330, %v331
        %v336 = vmul.u32 %v330, %v332
        %v337 = vshll.u32 %v334, 16
        %v338 = vshrl.u32 %v334, 16
        %v339 = vshll.u32 %v335, 16
        %v340 = vshrl.u32 %v335, 16
        %vm341 = vc.u32 %v333, %v337
        %v342 = vsel %vm341, 1, 0
        %v343 = vadd.s32 %v333, %v337
        %v344 = vadd.s32 %v336, %v342
        %vm345 = vc.u32 %v343, %v339
        %v346 = vsel %vm345, 1, 0
        %v347 = vadd.s32 %v343, %v339
        %v348 = vadd.s32 %v344, %v346
        %v349 = vadd.s32 %v348, %v338
        %v350 = vadd.s32 %v349, %v340
        %v351 = vmul.u32 %v306, %v297
        %v352 = vadd.s32 %v328, %v347
        %vm353 = vc.u32 %v328, %v347
        %v354 = vadd.s32 %v350, 1
        %v355 = vsel %vm353, %v354, %v350
        %v356 = vadd.s32 %v351, %v355
        %v357 = vadd.s32 %v356, 536870912
        %v358 = vshrl.u32 %v357, 30
        %v359 = vshll.u32 %v358, 30
        %v360 = vsub.s32 %v356, %v359
        %vm361 = vcmp.lt.s32.totalorder %v360, 0
        %v362 = vsub.s32 0, %v360
        %v363 = vsel %vm361, %v362, %v360
        %v364 = vclz %v363
        %v365 = vsub.s32 %v364, 2
        %vm366 = vcmp.gt.s32.totalorder 0, %v365
        %v367 = vsel %vm366, 0, %v365
        %v368 = vsub.s32 32, %v367
        %v369 = vshll.u32 %v360, %v367
        %v370 = vshrl.u32 %v352, %v368
        %v371 = vor.u32 %v369, %v370
        %v372 = vsub.s32 4294967266, %v367
        %v373 = vadd.s32 %v372, 127
        %v374 = vshll.u32 %v373, 23
        %v375 = vor.u32 4788187, %v374
        %v376 = vand.u32 2147483647, %v375
        %v378 = vcvt.s32.f32 %v371
        %v379 = vmul.f32 %v378, %v376
        %v380 = vxor.u32 %v379, 2147483648
        %v381 = vsel %vm260, %v380, %v379
        %v382 = vsub.s32 4, %v358
        %v383 = vsel %vm260, %v382, %v358
        %v384 = vsel %vm259, %v254, %v381
        %v385 = vsel %vm259, 0, %v383
        %v386 = vmul.f32 %v384, %v384
        %v387 = vmul.f32 %v386, -0.001358992
        %v388 = vadd.f32 %v387, 0.041655596
        %v389 = vmul.f32 %v386, %v388
        %v390 = vadd.f32 %v389, -0.4999988
        %v391 = vmul.f32 %v386, %v390
        %v392 = vadd.f32 1.0, %v391
        %v393 = vmul.f32 %v384, %v384
        %v394 = vmul.f32 %v393, -0.00019511016
        %v395 = vadd.f32 %v394, 0.008332121
        %v396 = vmul.f32 %v393, %v395
        %v397 = vadd.f32 %v396, -0.16666654
        %v398 = vmul.f32 %v393, %v397
        %v399 = vadd.f32 %v398, 1.0
        %v400 = vmul.f32 %v399, %v384
        %vm401 = vweird.f32 %v254
        %v402 = vand.u32 %v385, 3
        %vm403 = vcmp.lt.s32.totalorder %v402, 2
        %vm404 = vcmp.eq.s32.totalorder %v402, 0
        %v405 = vxor.u32 %v400, 2147483648
        %v406 = vsel %vm404, %v392, %v405
        %vm407 = vcmp.eq.s32.totalorder %v402, 2
        %v408 = vxor.u32 %v392, 2147483648
        %v409 = vsel %vm407, %v408, %v400
        %v410 = vsel %vm403, %v406, %v409
        %v411 = vsel %vm401, nan, %v410
        %v412 = vand.u32 2147483647, %v255
        %vm413 = vcmp.le.f32.partialorder %v412, 0.7853982
        %vm414 = vcmp.lt.s32.totalorder %v255, 0
        %v415 = vand.u32 %v255, 2139095040
        %v416 = vshrl.u32 %v415, 23
        %v417 = vsub.s32 %v416, 127
        %v418 = vand.u32 2147483647, %v255
        %v419 = vand.u32 %v418, 8388607
        %v420 = vor.u32 %v419, 8388608
        %v421 = vsub.s32 0, %v420
        %v422 = vadd.s32 %v417, 1
        %vm423 = vcmp.gt.s32.totalorder %v422, 0
        %v424 = vsel %vm423, %v422, 0
        %v425 = vshrl.u32 %v424, 5
        %v426 = vand.u32 %v424, 31
        %v427 = vsub.s32 32, %v426
        %v428 = vshrl.u32 683565275, %v427
        %v429 = vshll.u32 683565275, %v426
        %v430 = vshrl.u32 2475754826, %v427
        %v431 = vor.u32 %v429, %v430
        %v432 = vshll.u32 2475754826, %v426
        %v433 = vshrl.u32 2131351028, %v427
        %v434 = vor.u32 %v432, %v433
        %v435 = vshll.u32 2131351028, %v426
        %v436 = vshrl.u32 2102212464, %v427
        %v437 = vor.u32 %v435, %v436
        %v438 = vshll.u32 2102212464, %v426
        %v439 = vshrl.u32 920167782, %v427
        %v440 = vor.u32 %v438, %v439
        %v441 = vshll.u32 920167782, %v426
        %v442 = vshrl.u32 1326507024, %v427
        %v443 = vor.u32 %v441, %v442
        %vm444 = vcmp.lt.s32.totalorder %v425, 1
        %vm445 = vcmp.lt.s32.totalorder %v425, 2
        %vm446 = vcmp.lt.s32.totalorder %v425, 3
        %vm447 = vcmp.lt.s32.totalorder %v425, 4
        %v448 = vsel %vm444, %v428, %v431
        %v449 = vsel %vm447, %v437, 2102212464
        %v450 = vsel %vm446, %v434, %v449
        %v451 = vsel %vm445, %v448, %v450
        %v452 = vsel %vm444, %v431, %v434
        %v453 = vsel %vm447, %v440, 920167782
        %v454 = vsel %vm446, %v437, %v453
        %v455 = vsel %vm445, %v452, %v454
        %v456 = vsel %vm444, %v434, %v437
        %v457 = vsel %vm447, %v443, 1326507024
        %v458 = vsel %vm446, %v440, %v457
        %v459 = vsel %vm445, %v456, %v458
        %v460 = vshll.u32 %v420, 8
        %v461 = vand.u32 %v460, 65535
        %v462 = vshrl.u32 %v460, 16
        %v463 = vand.u32 %v459, 65535
        %v464 = vshrl.u32 %v459, 16
        %v465 = vmul.u32 %v461, %v463
        %v466 = vmul.u32 %v461, %v464
        %v467 = vmul.u32 %v462, %v463
        %v468 = vmul.u32 %v462, %v464
        %v469 = vshll.u32 %v466, 16
        %v470 = vshrl.u32 %v466, 16
        %v471 = vshll.u32 %v467, 16
        %v472 = vshrl.u32 %v467, 16
        %vm473 = vc.u32 %v465, %v469
        %v474 = vsel %vm473, 1, 0
        %v475 = vadd.s32 %v465, %v469
        %v476 = vadd.s32 %v468, %v474
        %vm477 = vc.u32 %v475, %v471
        %v478 = vsel %vm477, 1, 0
        %v479 = vadd.s32 %v475, %v471
        %v480 = vadd.s32 %v476, %v478
        %v481 = vadd.s32 %v480, %v470
        %v482 = vadd.s32 %v481, %v472
        %v483 = vand.u32 %v460, 65535
        %v484 = vshrl.u32 %v460, 16
        %v485 = vand.u32 %v455, 65535
        %v486 = vshrl.u32 %v455, 16
        %v487 = vmul.u32 %v483, %v485
        %v488 = vmul.u32 %v483, %v486
        %v489 = vmul.u32 %v484, %v485
        %v490 = vmul.u32 %v484, %v486
        %v491 = vshll.u32 %v488, 16
        %v492 = vshrl.u32 %v488, 16
        %v493 = vshll.u32 %v489, 16
        %v494 = vshrl.u32 %v489, 16
        %vm495 = vc.u32 %v487, %v491
        %v496 = vsel %vm495, 1, 0
        %v497 = vadd.s32 %v487, %v491
        %v498 = vadd.s32 %v490, %v496
        %vm499 = vc.u32 %v497, %v493
        %v500 = vsel %vm499, 1, 0
        %v501 = vadd.s32 %v497, %v493
        %v502 = vadd.s32 %v498, %v500
        %v503 = vadd.s32 %v502, %v492
        %v504 = vadd.s32 %v503, %v494
        %v505 = vmul.u32 %v460, %v451
        %v506 = vadd.s32 %v482, %v501
        %vm507 = vc.u32 %v482, %v501
        %v508 = vadd.s32 %v504, 1
        %v509 = vsel %vm507, %v508, %v504
        %v510 = vadd.s32 %v505, %v509
        %v511 = vadd.s32 %v510, 536870912
        %v512 = vshrl.u32 %v511, 30
        %v513 = vshll.u32 %v512, 30
        %v514 = vsub.s32 %v510, %v513
        %vm515 = vcmp.lt.s32.totalorder %v514, 0
        %v516 = vsub.s32 0, %v514
        %v517 = vsel %vm515, %v516, %v514
        %v518 = vclz %v517
        %v519 = vsub.s32 %v518, 2
        %vm520 = vcmp.gt.s32.totalorder 0, %v519
        %v521 = vsel %vm520, 0, %v519
        %v522 = vsub.s32 32, %v521
        %v523 = vshll.u32 %v514, %v521
        %v524 = vshrl.u32 %v506, %v522
        %v525 = vor.u32 %v523, %v524
        %v526 = vsub.s32 4294967266, %v521
        %v527 = vadd.s32 %v526, 127
        %v528 = vshll.u32 %v527, 23
        %v529 = vor.u32 4788187, %v528
        %v530 = vand.u32 2147483647, %v529
        %v532 = vcvt.s32.f32 %v525
        %v533 = vmul.f32 %v532, %v530
        %v534 = vxor.u32 %v533, 2147483648
        %v535 = vsel %vm414, %v534, %v533
        %v536 = vsub.s32 4, %v512
        %v537 = vsel %vm414, %v536, %v512
        %v538 = vsel %vm413, %v255, %v535
        %v539 = vsel %vm413, 0, %v537
        %v540 = vmul.f32 %v538, %v538
        %v541 = vmul.f32 %v540, -0.001358992
        %v542 = vadd.f32 %v541, 0.041655596
        %v543 = vmul.f32 %v540, %v542
        %v544 = vadd.f32 %v543, -0.4999988
        %v545 = vmul.f32 %v540, %v544
        %v546 = vadd.f32 1.0, %v545
        %v547 = vmul.f32 %v538, %v538
        %v548 = vmul.f32 %v547, -0.00019511016
        %v549 = vadd.f32 %v548, 0.008332121
        %v550 = vmul.f32 %v547, %v549
        %v551 = vadd.f32 %v550, -0.16666654
        %v552 = vmul.f32 %v547, %v551
        %v553 = vadd.f32 %v552, 1.0
        %v554 = vmul.f32 %v553, %v538
        %vm555 = vweird.f32 %v255
        %v556 = vand.u32 %v539, 3
        %vm557 = vcmp.lt.s32.totalorder %v556, 2
        %vm558 = vcmp.eq.s32.totalorder %v556, 0
        %v559 = vxor.u32 %v554, 2147483648
        %v560 = vsel %vm558, %v546, %v559
        %vm561 = vcmp.eq.s32.totalorder %v556, 2
        %v562 = vxor.u32 %v546, 2147483648
        %v563 = vsel %vm561, %v562, %v554
        %v564 = vsel %vm557, %v560, %v563
        %v565 = vsel %vm555, nan, %v564
        %v566 = vand.u32 2147483647, %v256
        %vm567 = vcmp.le.f32.partialorder %v566, 0.7853982
        %vm568 = vcmp.lt.s32.totalorder %v256, 0
        %v569 = vand.u32 %v256, 2139095040
        %v570 = vshrl.u32 %v569, 23
        %v571 = vsub.s32 %v570, 127
        %v572 = vand.u32 2147483647, %v256
        %v573 = vand.u32 %v572, 8388607
        %v574 = vor.u32 %v573, 8388608
        %v575 = vsub.s32 0, %v574
        %v576 = vadd.s32 %v571, 1
        %vm577 = vcmp.gt.s32.totalorder %v576, 0
        %v578 = vsel %vm577, %v576, 0
        %v579 = vshrl.u32 %v578, 5
        %v580 = vand.u32 %v578, 31
        %v581 = vsub.s32 32, %v580
        %v582 = vshrl.u32 683565275, %v581
        %v583 = vshll.u32 683565275, %v580
        %v584 = vshrl.u32 2475754826, %v581
        %v585 = vor.u32 %v583, %v584
        %v586 = vshll.u32 2475754826, %v580
        %v587 = vshrl.u32 2131351028, %v581
        %v588 = vor.u32 %v586, %v587
        %v589 = vshll.u32 2131351028, %v580
        %v590 = vshrl.u32 2102212464, %v581
        %v591 = vor.u32 %v589, %v590
        %v592 = vshll.u32 2102212464, %v580
        %v593 = vshrl.u32 920167782, %v581
        %v594 = vor.u32 %v592, %v593
        %v595 = vshll.u32 920167782, %v580
        %v596 = vshrl.u32 1326507024, %v581
        %v597 = vor.u32 %v595, %v596
        %vm598 = vcmp.lt.s32.totalorder %v579, 1
        %vm599 = vcmp.lt.s32.totalorder %v579, 2
        %vm600 = vcmp.lt.s32.totalorder %v579, 3
        %vm601 = vcmp.lt.s32.totalorder %v579, 4
        %v602 = vsel %vm598, %v582, %v585
        %v603 = vsel %vm601, %v591, 2102212464
        %v604 = vsel %vm600, %v588, %v603
        %v605 = vsel %vm599, %v602, %v604
        %v606 = vsel %vm598, %v585, %v588
        %v607 = vsel %vm601, %v594, 920167782
        %v608 = vsel %vm600, %v591, %v607
        %v609 = vsel %vm599, %v606, %v608
        %v610 = vsel %vm598, %v588, %v591
        %v611 = vsel %vm601, %v597, 1326507024
        %v612 = vsel %vm600, %v594, %v611
        %v613 = vsel %vm599, %v610, %v612
        %v614 = vshll.u32 %v574, 8
        %v615 = vand.u32 %v614, 65535
        %v616 = vshrl.u32 %v614, 16
        %v617 = vand.u32 %v613, 65535
        %v618 = vshrl.u32 %v613, 16
        %v619 = vmul.u32 %v615, %v617
        %v620 = vmul.u32 %v615, %v618
        %v621 = vmul.u32 %v616, %v617
        %v622 = vmul.u32 %v616, %v618
        %v623 = vshll.u32 %v620, 16
        %v624 = vshrl.u32 %v620, 16
        %v625 = vshll.u32 %v621, 16
        %v626 = vshrl.u32 %v621, 16
        %vm627 = vc.u32 %v619, %v623
        %v628 = vsel %vm627, 1, 0
        %v629 = vadd.s32 %v619, %v623
        %v630 = vadd.s32 %v622, %v628
        %vm631 = vc.u32 %v629, %v625
        %v632 = vsel %vm631, 1, 0
        %v633 = vadd.s32 %v629, %v625
        %v634 = vadd.s32 %v630, %v632
        %v635 = vadd.s32 %v634, %v624
        %v636 = vadd.s32 %v635, %v626
        %v637 = vand.u32 %v614, 65535
        %v638 = vshrl.u32 %v614, 16
        %v639 = vand.u32 %v609, 65535
        %v640 = vshrl.u32 %v609, 16
        %v641 = vmul.u32 %v637, %v639
        %v642 = vmul.u32 %v637, %v640
        %v643 = vmul.u32 %v638, %v639
        %v644 = vmul.u32 %v638, %v640
        %v645 = vshll.u32 %v642, 16
        %v646 = vshrl.u32 %v642, 16
        %v647 = vshll.u32 %v643, 16
        %v648 = vshrl.u32 %v643, 16
        %vm649 = vc.u32 %v641, %v645
        %v650 = vsel %vm649, 1, 0
        %v651 = vadd.s32 %v641, %v645
        %v652 = vadd.s32 %v644, %v650
        %vm653 = vc.u32 %v651, %v647
        %v654 = vsel %vm653, 1, 0
        %v655 = vadd.s32 %v651, %v647
        %v656 = vadd.s32 %v652, %v654
        %v657 = vadd.s32 %v656, %v646
        %v658 = vadd.s32 %v657, %v648
        %v659 = vmul.u32 %v614, %v605
        %v660 = vadd.s32 %v636, %v655
        %vm661 = vc.u32 %v636, %v655
        %v662 = vadd.s32 %v658, 1
        %v663 = vsel %vm661, %v662, %v658
        %v664 = vadd.s32 %v659, %v663
        %v665 = vadd.s32 %v664, 536870912
        %v666 = vshrl.u32 %v665, 30
        %v667 = vshll.u32 %v666, 30
        %v668 = vsub.s32 %v664, %v667
        %vm669 = vcmp.lt.s32.totalorder %v668, 0
        %v670 = vsub.s32 0, %v668
        %v671 = vsel %vm669, %v670, %v668
        %v672 = vclz %v671
        %v673 = vsub.s32 %v672, 2
        %vm674 = vcmp.gt.s32.totalorder 0, %v673
        %v675 = vsel %vm674, 0, %v673
        %v676 = vsub.s32 32, %v675
        %v677 = vshll.u32 %v668, %v675
        %v678 = vshrl.u32 %v660, %v676
        %v679 = vor.u32 %v677, %v678
        %v680 = vsub.s32 4294967266, %v675
        %v681 = vadd.s32 %v680, 127
        %v682 = vshll.u32 %v681, 23
        %v683 = vor.u32 4788187, %v682
        %v684 = vand.u32 2147483647, %v683
        %v686 = vcvt.s32.f32 %v679
        %v687 = vmul.f32 %v686, %v684
        %v688 = vxor.u32 %v687, 2147483648
        %v689 = vsel %vm568, %v688, %v687
        %v690 = vsub.s32 4, %v666
        %v691 = vsel %vm568, %v690, %v666
        %v692 = vsel %vm567, %v256, %v689
        %v693 = vsel %vm567, 0, %v691
        %v694 = vmul.f32 %v692, %v692
        %v695 = vmul.f32 %v694, -0.001358992
        %v696 = vadd.f32 %v695, 0.041655596
        %v697 = vmul.f32 %v694, %v696
        %v698 = vadd.f32 %v697, -0.4999988
        %v699 = vmul.f32 %v694, %v698
        %v700 = vadd.f32 1.0, %v699
        %v701 = vmul.f32 %v692, %v692
        %v702 = vmul.f32 %v701, -0.00019511016
        %v703 = vadd.f32 %v702, 0.008332121
        %v704 = vmul.f32 %v701, %v703
        %v705 = vadd.f32 %v704, -0.16666654
        %v706 = vmul.f32 %v701, %v705
        %v707 = vadd.f32 %v706, 1.0
        %v708 = vmul.f32 %v707, %v692
        %vm709 = vweird.f32 %v256
        %v710 = vand.u32 %v693, 3
        %vm711 = vcmp.lt.s32.totalorder %v710, 2
        %vm712 = vcmp.eq.s32.totalorder %v710, 0
        %v713 = vxor.u32 %v708, 2147483648
        %v714 = vsel %vm712, %v700, %v713
        %vm715 = vcmp.eq.s32.totalorder %v710, 2
        %v716 = vxor.u32 %v700, 2147483648
        %v717 = vsel %vm715, %v716, %v708
        %v718 = vsel %vm711, %v714, %v717
        %v719 = vsel %vm709, nan, %v718
        %v720 = vand.u32 2147483647, %v257
        %vm721 = vcmp.le.f32.partialorder %v720, 0.7853982
        %vm722 = vcmp.lt.s32.totalorder %v257, 0
        %v723 = vand.u32 %v257, 2139095040
        %v724 = vshrl.u32 %v723, 23
        %v725 = vsub.s32 %v724, 127
        %v726 = vand.u32 2147483647, %v257
        %v727 = vand.u32 %v726, 8388607
        %v728 = vor.u32 %v727, 8388608
        %v729 = vsub.s32 0, %v728
        %v730 = vadd.s32 %v725, 1
        %vm731 = vcmp.gt.s32.totalorder %v730, 0
        %v732 = vsel %vm731, %v730, 0
        %v733 = vshrl.u32 %v732, 5
        %v734 = vand.u32 %v732, 31
        %v735 = vsub.s32 32, %v734
        %v736 = vshrl.u32 683565275, %v735
        %v737 = vshll.u32 683565275, %v734
        %v738 = vshrl.u32 2475754826, %v735
        %v739 = vor.u32 %v737, %v738
        %v740 = vshll.u32 2475754826, %v734
        %v741 = vshrl.u32 2131351028, %v735
        %v742 = vor.u32 %v740, %v741
        %v743 = vshll.u32 2131351028, %v734
        %v744 = vshrl.u32 2102212464, %v735
        %v745 = vor.u32 %v743, %v744
        %v746 = vshll.u32 2102212464, %v734
        %v747 = vshrl.u32 920167782, %v735
        %v748 = vor.u32 %v746, %v747
        %v749 = vshll.u32 920167782, %v734
        %v750 = vshrl.u32 1326507024, %v735
        %v751 = vor.u32 %v749, %v750
        %vm752 = vcmp.lt.s32.totalorder %v733, 1
        %vm753 = vcmp.lt.s32.totalorder %v733, 2
        %vm754 = vcmp.lt.s32.totalorder %v733, 3
        %vm755 = vcmp.lt.s32.totalorder %v733, 4
        %v756 = vsel %vm752, %v736, %v739
        %v757 = vsel %vm755, %v745, 2102212464
        %v758 = vsel %vm754, %v742, %v757
        %v759 = vsel %vm753, %v756, %v758
        %v760 = vsel %vm752, %v739, %v742
        %v761 = vsel %vm755, %v748, 920167782
        %v762 = vsel %vm754, %v745, %v761
        %v763 = vsel %vm753, %v760, %v762
        %v764 = vsel %vm752, %v742, %v745
        %v765 = vsel %vm755, %v751, 1326507024
        %v766 = vsel %vm754, %v748, %v765
        %v767 = vsel %vm753, %v764, %v766
        %v768 = vshll.u32 %v728, 8
        %v769 = vand.u32 %v768, 65535
        %v770 = vshrl.u32 %v768, 16
        %v771 = vand.u32 %v767, 65535
        %v772 = vshrl.u32 %v767, 16
        %v773 = vmul.u32 %v769, %v771
        %v774 = vmul.u32 %v769, %v772
        %v775 = vmul.u32 %v770, %v771
        %v776 = vmul.u32 %v770, %v772
        %v777 = vshll.u32 %v774, 16
        %v778 = vshrl.u32 %v774, 16
        %v779 = vshll.u32 %v775, 16
        %v780 = vshrl.u32 %v775, 16
        %vm781 = vc.u32 %v773, %v777
        %v782 = vsel %vm781, 1, 0
        %v783 = vadd.s32 %v773, %v777
        %v784 = vadd.s32 %v776, %v782
        %vm785 = vc.u32 %v783, %v779
        %v786 = vsel %vm785, 1, 0
        %v787 = vadd.s32 %v783, %v779
        %v788 = vadd.s32 %v784, %v786
        %v789 = vadd.s32 %v788, %v778
        %v790 = vadd.s32 %v789, %v780
        %v791 = vand.u32 %v768, 65535
        %v792 = vshrl.u32 %v768, 16
        %v793 = vand.u32 %v763, 65535
        %v794 = vshrl.u32 %v763, 16
        %v795 = vmul.u32 %v791, %v793
        %v796 = vmul.u32 %v791, %v794
        %v797 = vmul.u32 %v792, %v793
        %v798 = vmul.u32 %v792, %v794
        %v799 = vshll.u32 %v796, 16
        %v800 = vshrl.u32 %v796, 16
        %v801 = vshll.u32 %v797, 16
        %v802 = vshrl.u32 %v797, 16
        %vm803 = vc.u32 %v795, %v799
        %v804 = vsel %vm803, 1, 0
        %v805 = vadd.s32 %v795, %v799
        %v806 = vadd.s32 %v798, %v804
        %vm807 = vc.u32 %v805, %v801
        %v808 = vsel %vm807, 1, 0
        %v809 = vadd.s32 %v805, %v801
        %v810 = vadd.s32 %v806, %v808
        %v811 = vadd.s32 %v810, %v800
        %v812 = vadd.s32 %v811, %v802
        %v813 = vmul.u32 %v768, %v759
        %v814 = vadd.s32 %v790, %v809
        %vm815 = vc.u32 %v790, %v809
        %v816 = vadd.s32 %v812, 1
        %v817 = vsel %vm815, %v816, %v812
        %v818 = vadd.s32 %v813, %v817
        %v819 = vadd.s32 %v818, 536870912
        %v820 = vshrl.u32 %v819, 30
        %v821 = vshll.u32 %v820, 30
        %v822 = vsub.s32 %v818, %v821
        %vm823 = vcmp.lt.s32.totalorder %v822, 0
        %v824 = vsub.s32 0, %v822
        %v825 = vsel %vm823, %v824, %v822
        %v826 = vclz %v825
        %v827 = vsub.s32 %v826, 2
        %vm828 = vcmp.gt.s32.totalorder 0, %v827
        %v829 = vsel %vm828, 0, %v827
        %v830 = vsub.s32 32, %v829
        %v831 = vshll.u32 %v822, %v829
        %v832 = vshrl.u32 %v814, %v830
        %v833 = vor.u32 %v831, %v832
        %v834 = vsub.s32 4294967266, %v829
        %v835 = vadd.s32 %v834, 127
        %v836 = vshll.u32 %v835, 23
        %v837 = vor.u32 4788187, %v836
        %v838 = vand.u32 2147483647, %v837
        %v840 = vcvt.s32.f32 %v833
        %v841 = vmul.f32 %v840, %v838
        %v842 = vxor.u32 %v841, 2147483648
        %v843 = vsel %vm722, %v842, %v841
        %v844 = vsub.s32 4, %v820
        %v845 = vsel %vm722, %v844, %v820
        %v846 = vsel %vm721, %v257, %v843
        %v847 = vsel %vm721, 0, %v845
        %v848 = vmul.f32 %v846, %v846
        %v849 = vmul.f32 %v848, -0.001358992
        %v850 = vadd.f32 %v849, 0.041655596
        %v851 = vmul.f32 %v848, %v850
        %v852 = vadd.f32 %v851, -0.4999988
        %v853 = vmul.f32 %v848, %v852
        %v854 = vadd.f32 1.0, %v853
        %v855 = vmul.f32 %v846, %v846
        %v856 = vmul.f32 %v855, -0.00019511016
        %v857 = vadd.f32 %v856, 0.008332121
        %v858 = vmul.f32 %v855, %v857
        %v859 = vadd.f32 %v858, -0.16666654
        %v860 = vmul.f32 %v855, %v859
        %v861 = vadd.f32 %v860, 1.0
        %v862 = vmul.f32 %v861, %v846
        %vm863 = vweird.f32 %v257
        %v864 = vand.u32 %v847, 3
        %vm865 = vcmp.lt.s32.totalorder %v864, 2
        %vm866 = vcmp.eq.s32.totalorder %v864, 0
        %v867 = vxor.u32 %v862, 2147483648
        %v868 = vsel %vm866, %v854, %v867
        %vm869 = vcmp.eq.s32.totalorder %v864, 2
        %v870 = vxor.u32 %v854, 2147483648
        %v871 = vsel %vm869, %v870, %v862
        %v872 = vsel %vm865, %v868, %v871
        %v873 = vsel %vm863, nan, %v872
        %874 = vst [vmem:[%s152] sm:$0xff] %v411
        %875 = vst [vmem:[%s152 + $0x8] sm:$0xff] %v565
        %876 = vst [vmem:[%s152 + $0x10] sm:$0xff] %v719
        %877 = vst [vmem:[%s152 + $0x18] sm:$0xff] %v873
        %s878 = sand.u32 %s68, 1
        %s879 = scalar_lea.sflag [#allocation4], %s878
        %s880 = sand.u32 %s68, 1
        %s881 = smul.addr %s880, 32
        %s882 = scalar_lea.vmem [#allocation5], %s881
        // Predicated region
        $region29: #{tpu_custom_call.1} parent=23 // pred_check
          %p883 = pneg %p78
        $region30: #{tpu_custom_call.1} parent=23 // pred_check_branch
          %885 = sbr.rel (%p883) target = $region32
        $region31: #{tpu_custom_call.1} parent=23 // pred_region
          %s886 = smul.u32 4, %s23
          %888 = vsyncadd %s879, 0
          %s889 = smul.addr %s22, 4
          %s890 = sadd.s32 %s886, %s889
          %s891 = smul.addr %s890, 8
          %s892 = scalar_lea.hbm %s1, %s891
          %s894 = sshll.u32 %s882, 4
          %s895 = int_to_ptr.vmem [resolvable:$true] %s894
          %s896 = sshll.u32 %s892, 4
          %s897 = int_to_ptr.hbm [resolvable:$true] %s896
          %899 = dma.vmem_to_hbm [thread:$0]  %s895, 512, %s897, %s879
        $region32: #{tpu_custom_call.1} parent=23 // pred_fallthru
          _
      $region24: #{tpu_custom_call.1} parent=5 // pred_fallthru
        _
      %p900 = scmp.le.s32.totalorder 2, %s13
      // Predicated region
      $region33: #{tpu_custom_call.1} parent=5 // pred_check
        %p901 = pneg %p900
      $region34: #{tpu_custom_call.1} parent=5 // pred_check_branch
        %903 = sbr.rel (%p901) target = $region36
      $region35: #{tpu_custom_call.1} parent=5 // pred_region
        %s904 = ssub.s32 %s13, 2
        // Predicated region
        $region37: #{tpu_custom_call.1} parent=35 // pred_check
          %p905 = pneg %p84
        $region38: #{tpu_custom_call.1} parent=35 // pred_check_branch
          %907 = sbr.rel (%p905) target = $region40
        $region39: #{tpu_custom_call.1} parent=35 // pred_region
          %s908 = sand.u32 %s69, 1
          %s909 = scalar_lea.sflag [#allocation4], %s908
          %s910 = sand.u32 %s69, 1
          %s911 = smul.addr %s910, 32
          %s912 = scalar_lea.vmem [#allocation5], %s911
          %914 = dma.done %s909, 512
        $region40: #{tpu_custom_call.1} parent=35 // pred_fallthru
          _
      $region36: #{tpu_custom_call.1} parent=5 // pred_fallthru
        _
    $region6: #{tpu_custom_call.1} parent=1 // loop_footer
      %s17 = sadd.s32 1, %s13
    $region7: #{tpu_custom_call.1} parent=1 // loop_footer_branch
      %12 = sbr.rel target = $region3
    $region8: #{tpu_custom_call.1} parent=1 // loop_exit
      _
    %915 = vsyncpa [#allocation3], 1
    %s916 = scalar_lea.sflag [#allocation3], 1
    %917 = vsyncpa %s916, 1
    %918 = vsyncpa [#allocation4], 1
    %s919 = scalar_lea.sflag [#allocation4], 1
    %920 = vsyncpa %s919, 1

</llo_original>
